<compile_context>
chip_gen: v7x
topology: tpu7x:2x2x1
jax: 0.10.0
libtpu: 0.0.40
codegen_flags: <defaults>
</compile_context>

<pallas_src>
import functools

import jax
import jax.numpy as jnp
from jax.experimental import pallas as pl
from jax.experimental.pallas import tpu as pltpu

_MIB = 1024 * 1024


def _device_tuning():
    """Per-TPU-generation (block_target_bytes, vmem_limit_bytes)."""
    try:
        kind = jax.devices()[0].device_kind.lower()
    except Exception:  # no TPU visible at trace time -> safe defaults
        kind = ""
    if "v5 lite" in kind or "v5lite" in kind or "v5e" in kind:
        # v5e: ~0.82 TB/s HBM, default scoped VMEM only 16 MiB -> the explicit
        # limit is load-bearing; a few-MiB blocks already keep overhead <7%.
        return 6 * _MIB, 32 * _MIB
    if "v6" in kind:
        # v6e: 128 MiB VMEM easily holds 2 x 12 MiB x 2 pipeline buffers.
        return 12 * _MIB, 80 * _MIB
    if "v7" in kind:
        # v7x: 3.2 TB/s HBM but only 64 MiB physical VMEM; 2 inputs x ~7 MiB
        # x 2 buffers (~28 MiB) stays well under a 40 MiB scoped limit.
        return 7 * _MIB, 40 * _MIB
    return 8 * _MIB, 48 * _MIB


def _contrastive_kernel(x0_ref, x1_ref, y_ref, out_ref, *,
                        margin, n_rows, tile_n, inner_steps):
    """One grid step: contrastive loss partial sum for a (tile_n, D) row block.

    x0_ref, x1_ref : VMEM (tile_n, D)  input dtype (cast to f32 on-chip)
    y_ref          : VMEM (tile_n, 1)  label dtype (cast to f32 on-chip)
    out_ref        : VMEM (8, 128)     f32 per-slice partial-sum accumulator,
                     resident across the inner ("arbitrary") grid axis; only
                     element [0, 0] carries the running sum, rest stay zero.
    """
    p = pl.program_id(0)   # parallel slice (megacore split on v7x)
    i = pl.program_id(1)   # sequential row-chunk index within the slice

    @pl.when(i == 0)
    def _():
        out_ref[...] = jnp.zeros_like(out_ref)

    # Cast on-chip (VPU, hidden under DMA); all arithmetic in f32.
    diff = x0_ref[...].astype(jnp.float32) - x1_ref[...].astype(jnp.float32)
    dist_sq = jnp.sum(diff * diff, axis=1, keepdims=True)          # (tile_n, 1)
    dist = jnp.sqrt(dist_sq)
    mdist = jnp.maximum(jnp.float32(margin) - dist, 0.0)
    y = y_ref[...].astype(jnp.float32)
    loss = y * dist_sq + (1.0 - y) * (mdist * mdist)                # (tile_n, 1)

    # Mask ragged row tail + any overshoot tile (index_map is clamped so the
    # DMA stays in bounds; the logical tile id here is NOT clamped).  Mask is
    # applied AFTER all arithmetic so garbage inf/NaN cannot propagate.
    tile_id = p * inner_steps + i
    row = tile_id * tile_n + jax.lax.broadcasted_iota(jnp.int32, loss.shape, 0)
    loss = jnp.where(row < n_rows, loss, 0.0)

    # Sublane reduce to a (1,1) per-step partial, then one lane-dense vreg add
    # into the resident accumulator (only element [0,0] receives the partial).
    partial = jnp.sum(loss, axis=0, keepdims=True)                  # (1, 1)
    sub = jax.lax.broadcasted_iota(jnp.int32, out_ref.shape, 0)
    lane = jax.lax.broadcasted_iota(jnp.int32, out_ref.shape, 1)
    out_ref[...] += jnp.where((sub == 0) & (lane == 0), partial, 0.0)


def contrastive_loss(x0, x1, y, margin=1.0, block_target_bytes=None):
    """JAX/Pallas equivalent of ContrastiveLoss.forward(x0, x1, y)."""
    # check_type_forward (host-side shape checks)
    assert x0.ndim == 2 and x1.ndim == 2 and y.ndim == 1
    assert x0.shape == x1.shape
    assert x1.shape[0] == y.shape[0]
    assert x1.shape[0] > 0

    n, d = x0.shape
    # No wrapper-side astype for y: reshape only, cast happens on-chip.
    y2 = y.reshape(n, 1)

    dev_block, vmem_limit = _device_tuning()
    if block_target_bytes is None:
        block_target_bytes = dev_block

    in_itemsize = jnp.dtype(x0.dtype).itemsize
    y_itemsize = jnp.dtype(y2.dtype).itemsize

    # Row-block sizing: largest multiple of 32 rows (sublane-tile friendly for
    # f32/bf16/int8) under the per-input byte target, in the *input* dtype.
    tile_n = max(32, (block_target_bytes // (in_itemsize * d)) // 32 * 32)
    if tile_n >= n:
        tile_n = n          # single full block; no (8,128) constraint issue
        total_tiles = 1
    else:
        total_tiles = pl.cdiv(n, tile_n)

    # Make sure the double-buffered footprint fits under the scoped limit.
    footprint = (2 * 2 * tile_n * d * in_itemsize    # x0 + x1, 2 buffers each
                 + 2 * tile_n * y_itemsize           # y, 2 buffers
                 + 8 * 128 * 4                       # resident output blocks
                 + 2 * _MIB)                         # slack
    vmem_limit = int(max(vmem_limit, footprint))
    # TODO(synk): for pathologically wide D (minimum footprint > physical VMEM
    # on v7x) add a feature-dim grid axis with a dist_sq VMEM scratch; also
    # consider an MXU ones-vector reduce for bf16 inputs with D >= 128.

    # Split row tiles across up to 2 TensorCores (v7x); 1-way elsewhere/tiny.
    num_parallel = 2 if total_tiles >= 2 else 1
    inner_steps = pl.cdiv(total_tiles, num_parallel)

    def in_map(p, i):
        t = p * inner_steps + i
        t = jnp.minimum(t, total_tiles - 1)   # keep DMA in bounds; mask in kernel
        return (t, 0)

    kernel = functools.partial(
        _contrastive_kernel,
        margin=float(margin), n_rows=n, tile_n=tile_n, inner_steps=inner_steps)

    partials = pl.pallas_call(
        kernel,
        out_shape=jax.ShapeDtypeStruct((8, 128 * num_parallel), jnp.float32),
        grid=(num_parallel, inner_steps),
        in_specs=[
            pl.BlockSpec((tile_n, d), in_map),   # x0
            pl.BlockSpec((tile_n, d), in_map),   # x1
            pl.BlockSpec((tile_n, 1), in_map),   # y (original dtype)
        ],
        out_specs=pl.BlockSpec((8, 128), lambda p, i: (0, p)),
        compiler_params=pltpu.CompilerParams(
            dimension_semantics=("parallel", "arbitrary"),
            vmem_limit_bytes=vmem_limit),
    )(x0, x1, y2)

    # Tiny final reduction (only [0, k*128] elements are nonzero) + normalize.
    return jnp.sum(partials) / 2.0 / n


def _reference(x0, x1, y, margin=1.0):
    diff = x0 - x1
    dist_sq = jnp.sum(diff * diff, axis=1)
    dist = jnp.sqrt(dist_sq)
    mdist = jnp.maximum(margin - dist, 0.0)
    loss = y * dist_sq + (1.0 - y) * mdist * mdist
    return jnp.sum(loss) / 2.0 / x0.shape[0]


if __name__ == "__main__":
    key = jax.random.PRNGKey(0)
    k0, k1, k2, k3, k4, k5 = jax.random.split(key, 6)

    # Case 1: small 2-D embeddings (batch=8, hidden=32), single-block path.
    N, D = 8, 32
    x0 = jax.random.normal(k0, (N, D), dtype=jnp.float32)
    x1 = jax.random.normal(k1, (N, D), dtype=jnp.float32)
    y = (jax.random.uniform(k2, (N,)) > 0.5).astype(jnp.float32)

    out = jax.block_until_ready(contrastive_loss(x0, x1, y, margin=1.0))
    ref = _reference(x0, x1, y, margin=1.0)
    assert jnp.allclose(out, ref, rtol=1e-5, atol=1e-6), (out, ref)

    # Case 2: multi-tile + ragged-tail + 2-way parallel path (tiny block
    # target forces several grid steps so masking/accumulation is exercised).
    N2, D2 = 50, 32
    x0b = jax.random.normal(k3, (N2, D2), dtype=jnp.float32)
    x1b = jax.random.normal(k4, (N2, D2), dtype=jnp.float32)
    yb = (jax.random.uniform(k5, (N2,)) > 0.5).astype(jnp.float32)

    out2 = jax.block_until_ready(
        contrastive_loss(x0b, x1b, yb, margin=1.0, block_target_bytes=4096))
    ref2 = _reference(x0b, x1b, yb, margin=1.0)
    assert jnp.allclose(out2, ref2, rtol=1e-5, atol=1e-6), (out2, ref2)

    # Case 3: odd number of tiles -> exercises the clamped index_map +
    # fully-masked overshoot tile on the second parallel slice.
    N3 = 80
    x0c = jax.random.normal(k0, (N3, D2), dtype=jnp.float32)
    x1c = jax.random.normal(k1, (N3, D2), dtype=jnp.float32)
    yc = (jax.random.uniform(k2, (N3,)) > 0.5).astype(jnp.float32)

    out3 = jax.block_until_ready(
        contrastive_loss(x0c, x1c, yc, margin=1.0, block_target_bytes=4096))
    ref3 = _reference(x0c, x1c, yc, margin=1.0)
    assert jnp.allclose(out3, ref3, rtol=1e-5, atol=1e-6), (out3, ref3)

    print("KERNEL_OK")
</pallas_src>

<mosaic_0001>
module attributes {stable_mosaic.version = 11 : i64} {
  func.func @_contrastive_kernel(%arg0: i32, %arg1: i32, %arg2: memref<8x32xf32, #tpu.memory_space<vmem>>, %arg3: memref<8x32xf32, #tpu.memory_space<vmem>>, %arg4: memref<8x1xf32, #tpu.memory_space<vmem>>, %arg5: memref<8x128xf32, #tpu.memory_space<vmem>>) attributes {dimension_semantics = [#tpu.dimension_semantics<parallel>, #tpu.dimension_semantics<arbitrary>], iteration_bounds = array<i64: 1, 1>, scalar_prefetch = 0 : i64, scratch_operands = 0 : i64, tpu.core_type = #tpu.core_type<tc>, window_params = [{transform_indices = @transform_0, window_bounds = array<i64: 8, 32>}, {transform_indices = @transform_1, window_bounds = array<i64: 8, 32>}, {transform_indices = @transform_2, window_bounds = array<i64: 8, 1>}, {transform_indices = @transform_3, window_bounds = array<i64: 8, 128>}]} {
    %c0_i32 = arith.constant 0 : i32
    %0 = arith.cmpi eq, %arg1, %c0_i32 : i32
    %1 = arith.extui %0 : i1 to i32
    %c0_i32_0 = arith.constant 0 : i32
    %2 = arith.cmpi ne, %1, %c0_i32_0 : i32
    scf.if %2 {
      %cst_19 = arith.constant 0.000000e+00 : f32
      %47 = vector.broadcast %cst_19 : f32 to vector<8x128xf32>
      %c0_20 = arith.constant 0 : index
      %c0_21 = arith.constant 0 : index
      %48 = vector.load %arg5[%c0_20, %c0_21] : memref<8x128xf32, #tpu.memory_space<vmem>>, vector<8x128xf32>
      tpu.vector_store %arg5[%c0_20, %c0_21], %47 {strides = array<i32>} : memref<8x128xf32, #tpu.memory_space<vmem>>, vector<8x128xf32>,
    } else {
    }
    %c0 = arith.constant 0 : index
    %c0_1 = arith.constant 0 : index
    %3 = vector.load %arg2[%c0, %c0_1] : memref<8x32xf32, #tpu.memory_space<vmem>>, vector<8x32xf32>
    %c0_2 = arith.constant 0 : index
    %c0_3 = arith.constant 0 : index
    %4 = vector.load %arg3[%c0_2, %c0_3] : memref<8x32xf32, #tpu.memory_space<vmem>>, vector<8x32xf32>
    %5 = arith.subf %3, %4 : vector<8x32xf32>
    %6 = arith.mulf %5, %5 : vector<8x32xf32>
    %cst = arith.constant dense<0.000000e+00> : vector<8xf32>
    %7 = vector.multi_reduction <add>, %6, %cst [1] : vector<8x32xf32> to vector<8xf32>
    %8 = vector.shape_cast %7 : vector<8xf32> to vector<8x1xf32>
    %9 = math.sqrt %8 : vector<8x1xf32>
    %cst_4 = arith.constant 1.000000e+00 : f32
    %10 = vector.broadcast %cst_4 : f32 to vector<8x1xf32>
    %11 = arith.subf %10, %9 : vector<8x1xf32>
    %cst_5 = arith.constant 0.000000e+00 : f32
    %12 = vector.broadcast %cst_5 : f32 to vector<8x1xf32>
    %13 = arith.maximumf %11, %12 : vector<8x1xf32>
    %c0_6 = arith.constant 0 : index
    %c0_7 = arith.constant 0 : index
    %14 = vector.load %arg4[%c0_6, %c0_7] : memref<8x1xf32, #tpu.memory_space<vmem>>, vector<8x1xf32>
    %15 = arith.mulf %14, %8 : vector<8x1xf32>
    %cst_8 = arith.constant 1.000000e+00 : f32
    %16 = vector.broadcast %cst_8 : f32 to vector<8x1xf32>
    %17 = arith.subf %16, %14 : vector<8x1xf32>
    %18 = arith.mulf %13, %13 : vector<8x1xf32>
    %19 = arith.mulf %17, %18 : vector<8x1xf32>
    %20 = arith.addf %15, %19 : vector<8x1xf32>
    %c1_i32 = arith.constant 1 : i32
    %21 = arith.muli %arg0, %c1_i32 : i32
    %22 = arith.addi %21, %arg1 : i32
    %c8_i32 = arith.constant 8 : i32
    %23 = arith.muli %22, %c8_i32 : i32
    %24 = tpu.iota {dimensions = array<i32: 0>} : vector<8x1xi32>
    %25 = vector.broadcast %23 : i32 to vector<8x1xi32>
    %26 = arith.addi %25, %24 : vector<8x1xi32>
    %c8_i32_9 = arith.constant 8 : i32
    %27 = vector.broadcast %c8_i32_9 : i32 to vector<8x1xi32>
    %28 = arith.cmpi slt, %26, %27 : vector<8x1xi32>
    %cst_10 = arith.constant 0.000000e+00 : f32
    %29 = vector.broadcast %cst_10 : f32 to vector<8x1xf32>
    %30 = arith.select %28, %20, %29 : vector<8x1xi1>, vector<8x1xf32>
    %cst_11 = arith.constant dense<0.000000e+00> : vector<1xf32>
    %31 = vector.multi_reduction <add>, %30, %cst_11 [0] : vector<8x1xf32> to vector<1xf32>
    %32 = vector.shape_cast %31 : vector<1xf32> to vector<1x1xf32>
    %33 = tpu.iota {dimensions = array<i32: 0>} : vector<8x128xi32>
    %34 = tpu.iota {dimensions = array<i32: 1>} : vector<8x128xi32>
    %c0_12 = arith.constant 0 : index
    %c0_13 = arith.constant 0 : index
    %35 = vector.load %arg5[%c0_12, %c0_13] : memref<8x128xf32, #tpu.memory_space<vmem>>, vector<8x128xf32>
    %c0_i32_14 = arith.constant 0 : i32
    %36 = vector.broadcast %c0_i32_14 : i32 to vector<8x128xi32>
    %37 = arith.cmpi eq, %33, %36 : vector<8x128xi32>
    %c0_i32_15 = arith.constant 0 : i32
    %38 = vector.broadcast %c0_i32_15 : i32 to vector<8x128xi32>
    %39 = arith.cmpi eq, %34, %38 : vector<8x128xi32>
    %40 = arith.andi %37, %39 : vector<8x128xi1>
    %cst_16 = arith.constant 0.000000e+00 : f32
    %41 = vector.shape_cast %32 : vector<1x1xf32> to vector<1x1xf32>
    %42 = vector.broadcast %41 : vector<1x1xf32> to vector<8x128xf32>
    %43 = vector.broadcast %cst_16 : f32 to vector<8x128xf32>
    %44 = arith.select %40, %42, %43 : vector<8x128xi1>, vector<8x128xf32>
    %45 = arith.addf %35, %44 : vector<8x128xf32>
    %c0_17 = arith.constant 0 : index
    %c0_18 = arith.constant 0 : index
    %46 = vector.load %arg5[%c0_17, %c0_18] : memref<8x128xf32, #tpu.memory_space<vmem>>, vector<8x128xf32>
    tpu.vector_store %arg5[%c0_17, %c0_18], %45 {strides = array<i32>} : memref<8x128xf32, #tpu.memory_space<vmem>>, vector<8x128xf32>,
    return
  }
  func.func @transform_0(%arg0: i32, %arg1: i32) -> (i32, i32) {
    %c1_i32 = arith.constant 1 : i32
    %0 = arith.muli %arg0, %c1_i32 : i32
    %1 = arith.addi %0, %arg1 : i32
    %c0_i32 = arith.constant 0 : i32
    %2 = arith.minsi %1, %c0_i32 : i32
    %c0_i32_0 = arith.constant 0 : i32
    %c0_i32_1 = arith.constant 0 : i32
    return %2, %c0_i32_0 : i32, i32
  }
  func.func @transform_1(%arg0: i32, %arg1: i32) -> (i32, i32) {
    %c1_i32 = arith.constant 1 : i32
    %0 = arith.muli %arg0, %c1_i32 : i32
    %1 = arith.addi %0, %arg1 : i32
    %c0_i32 = arith.constant 0 : i32
    %2 = arith.minsi %1, %c0_i32 : i32
    %c0_i32_0 = arith.constant 0 : i32
    %c0_i32_1 = arith.constant 0 : i32
    return %2, %c0_i32_0 : i32, i32
  }
  func.func @transform_2(%arg0: i32, %arg1: i32) -> (i32, i32) {
    %c1_i32 = arith.constant 1 : i32
    %0 = arith.muli %arg0, %c1_i32 : i32
    %1 = arith.addi %0, %arg1 : i32
    %c0_i32 = arith.constant 0 : i32
    %2 = arith.minsi %1, %c0_i32 : i32
    %c0_i32_0 = arith.constant 0 : i32
    %c0_i32_1 = arith.constant 0 : i32
    return %2, %c0_i32_0 : i32, i32
  }
  func.func @transform_3(%arg0: i32, %arg1: i32) -> (i32, i32) {
    %c0_i32 = arith.constant 0 : i32
    %c0_i32_0 = arith.constant 0 : i32
    return %c0_i32, %arg0 : i32, i32
  }
}

</mosaic_0001>

<llo_original>
// kernel: tpu_custom_call.1
$region0: #{tpu_custom_call.1}
  #allocation0 [shape = 'u32[]', space=smem, size = 0x4, offset = 0x4, fixed_abs, tag = 'smem constant byte address 0x4 - core index']
  #allocation1 [shape = 'u32[144,128]{1,0:T(1,128)}', space=vmem, size = 0x12000, scoped, tag = 'internal scratch']
  %s0 = inlined_call_operand.vmem [shape: f32[8,32], index: 0, kind: input, shape index: {}]
  %s1 = inlined_call_operand.hbm [shape: f32[8,32], index: 1, kind: input, shape index: {}]
  %s2 = inlined_call_operand.vmem [shape: f32[8,1], index: 2, kind: input, shape index: {}]
  %s3 = inlined_call_operand.hbm [shape: f32[8,128], index: 3, kind: output, shape index: {}]
  %s4 = sld [smem:[#allocation0]]
  $region30: #{tpu_custom_call.1} parent=0
    _
  %s6 = ssub.s32 1, %s4
  %s7 = scalar_select 0, %s6, %s4
  $region1: #{tpu_custom_call.1} parent=0
    #allocation2 [shape = 'u8[4096]{0}', space=vmem, size = 0x1000, scoped, tag = 'input window, operand 1, single buffered']
    #allocation3 [shape = 's32[1]{0}', space=sflag, size = 0x4, scoped, tag = 'scoped memory for tpu_custom_call.1']
    #allocation4 [shape = 's32[1]{0}', space=sflag, size = 0x4, scoped, tag = 'scoped memory for tpu_custom_call.1']
    #allocation5 [shape = 'u8[4096]{0}', space=vmem, size = 0x1000, scoped, tag = 'output window, operand 0, single buffered']
    %8 = vsyncpa [#allocation3], 0
    %9 = vsyncpa [#allocation4], 0
    // Predicated region
    $region2: #{tpu_custom_call.1} parent=1 // pred_check
      _
    $region3: #{tpu_custom_call.1} parent=1 // pred_check_branch
      %11 = sbr.rel (0) target = $region5
    $region4: #{tpu_custom_call.1} parent=1 // pred_region
      %s12 = sadd.s32 0, 0
      %p13 = scmp.lt.s32.totalorder %s12, 0
      %s14 = scalar_select %p13, %s12, 0
      %p15 = scmp.lt.s32.totalorder %s14, 0
      %s16 = scalar_select %p15, %s14, 0
      %s17 = smul.addr %s16, 8
      %s18 = scalar_lea.vmem %s0, %s17
      %s19 = sadd.s32 0, 0
      %p20 = scmp.lt.s32.totalorder %s19, 0
      %s21 = scalar_select %p20, %s19, 0
    $region5: #{tpu_custom_call.1} parent=1 // pred_fallthru
      _
    // Predicated region
    $region6: #{tpu_custom_call.1} parent=1 // pred_check
      _
    $region7: #{tpu_custom_call.1} parent=1 // pred_check_branch
      %23 = sbr.rel (0) target = $region9
    $region8: #{tpu_custom_call.1} parent=1 // pred_region
      %s24 = sadd.s32 0, 0
      %p25 = scmp.lt.s32.totalorder %s24, 0
      %s26 = scalar_select %p25, %s24, 0
      %s28 = ssub.s32 128, 128
      %29 = vsyncadd [#allocation3], %s28
      %s30 = smul.addr %s26, 128
      %s31 = scalar_lea.hbm %s1, %s30
      %s33 = sshll.u32 [#allocation2], 4
      %s34 = int_to_ptr.vmem [resolvable:$true] %s33
      %36 = dma.hbm_to_vmem [thread:$0]  %s31, 128, %s34, [#allocation3]
    $region9: #{tpu_custom_call.1} parent=1 // pred_fallthru
      _
    // Predicated region
    $region10: #{tpu_custom_call.1} parent=1 // pred_check
      _
    $region11: #{tpu_custom_call.1} parent=1 // pred_check_branch
      %38 = sbr.rel (0) target = $region13
    $region12: #{tpu_custom_call.1} parent=1 // pred_region
      %s39 = sadd.s32 0, 0
      %p40 = scmp.lt.s32.totalorder %s39, 0
      %s41 = scalar_select %p40, %s39, 0
      %p42 = scmp.lt.s32.totalorder %s41, 0
      %s43 = scalar_select %p42, %s41, 0
      %s44 = smul.addr %s43, 8
      %s45 = scalar_lea.vmem %s2, %s44
      %s46 = sadd.s32 0, 0
      %p47 = scmp.lt.s32.totalorder %s46, 0
      %s48 = scalar_select %p47, %s46, 0
    $region13: #{tpu_custom_call.1} parent=1 // pred_fallthru
      _
    // Predicated region
    $region14: #{tpu_custom_call.1} parent=1 // pred_check
      _
    $region15: #{tpu_custom_call.1} parent=1 // pred_check_branch
      %50 = sbr.rel (0) target = $region17
    $region16: #{tpu_custom_call.1} parent=1 // pred_region
      %51 = dma.done [#allocation3], 128
    $region17: #{tpu_custom_call.1} parent=1 // pred_fallthru
      _
    %s52 = sadd.s32 0, 0
    %p53 = scmp.lt.s32.totalorder %s52, 0
    %s54 = scalar_select %p53, %s52, 0
    %p55 = scmp.lt.s32.totalorder %s54, 0
    %s56 = scalar_select %p55, %s54, 0
    %s57 = smul.addr %s56, 8
    %s58 = scalar_lea.vmem %s0, %s57
    %s59 = sadd.s32 0, 0
    %p60 = scmp.lt.s32.totalorder %s59, 0
    %s61 = scalar_select %p60, %s59, 0
    %p62 = scmp.lt.s32.totalorder %s61, 0
    %s63 = scalar_select %p62, %s61, 0
    %s64 = smul.addr %s63, 8
    %s65 = scalar_lea.vmem %s2, %s64
    %s66 = sadd.s32 0, 0
    %p67 = scmp.lt.s32.totalorder %s66, 0
    %s68 = scalar_select %p67, %s66, 0
    %p69 = scmp.lt.s32.totalorder %s68, 0
    %s70 = scalar_select %p69, %s68, 0
    %s71 = smul.addr %s70, 8
    %s72 = scalar_lea.vmem %s0, %s71
    %s73 = sadd.s32 0, 0
    %p74 = scmp.lt.s32.totalorder %s73, 0
    %s75 = scalar_select %p74, %s73, 0
    %s76 = sadd.s32 0, 0
    %p77 = scmp.lt.s32.totalorder %s76, 0
    %s78 = scalar_select %p77, %s76, 0
    %s79 = sadd.s32 0, 0
    %p80 = scmp.lt.s32.totalorder %s79, 0
    %s81 = scalar_select %p80, %s79, 0
    %p82 = scmp.lt.s32.totalorder %s81, 0
    %s83 = scalar_select %p82, %s81, 0
    %s84 = smul.addr %s83, 8
    %s85 = scalar_lea.vmem %s2, %s84
    %s86 = sadd.s32 0, 0
    %p87 = scmp.lt.s32.totalorder %s86, 0
    %s88 = scalar_select %p87, %s86, 0
    %p89 = scmp.eq.s32.totalorder 0, 0
    // Predicated region
    $region18: #{tpu_custom_call.1} parent=1 // pred_check
      %p90 = pneg %p89
    $region19: #{tpu_custom_call.1} parent=1 // pred_check_branch
      %92 = sbr.rel (%p90) target = $region21
    $region20: #{tpu_custom_call.1} parent=1 // pred_region
      %93 = vst [vmem:[#allocation5] sm:$0xff] 0.0
    $region21: #{tpu_custom_call.1} parent=1 // pred_fallthru
      _
    %v94 = vld [vmem:[%s72] sm:$0xff]
    %v95 = vld [vmem:[#allocation2] sm:$0xff]
    %v96 = vsub.f32 %v94, %v95
    %v97 = vmul.f32 %v96, %v96
    %vm98 = vcmask 261120
    %v99 = vsel %vm98, %v97, 0.0
    %100 = vadd.xlane.f32.xlu0 %v99
    %v101 = vpop.xlane.xlu0 %100
    %v102 = vrsqrt.pop %v101
    %v103 = vmul.f32 %v101, %v102
    %vm104 = vcmp.eq.f32.partialorder %v101, inf
    %v105 = vsel %vm104, %v101, %v103
    %vm106 = vcmp.eq.f32.partialorder %v101, 0.0
    %v107 = vand.u32 %v101, 2147483648
    %v108 = vsel %vm106, %v107, %v105
    %v109 = vsub.f32 1.0, %v108
    %v110 = vmax.f32 %v109, 0.0
    %v111 = vld [vmem:[%s85] sm:$0xff]
    %v112 = vmul.f32 %v111, %v101
    %v113 = vsub.f32 1.0, %v111
    %v114 = vmul.f32 %v110, %v110
    %v115 = vmul.f32 %v113, %v114
    %v116 = vadd.f32 %v112, %v115
    %s117 = sadd.s32 0, 0
    %s118 = smul.u32 %s117, 8
    %v119 = vlaneseq
    %v120 = vshrl.u32 %v119, 7
    %v121 = vstv %s118
    %v122 = vadd.s32 %v121, %v120
    %vm123 = vcmp.lt.s32.totalorder %v122, 8
    %v124 = vsel %vm123, %v116, 0.0
    %vm125 = vcmask 7168
    %v126 = vsel %vm125, %v124, 0.0
    %v127 = vrot.slane %v126, 4
    %v128 = vadd.f32 %v126, %v127
    %v129 = vrot.slane %v128, 2
    %v130 = vadd.f32 %v128, %v129
    %v131 = vrot.slane %v130, 1
    %v132 = vadd.f32 %v130, %v131
    %v133 = vlaneseq
    %v134 = vand.u32 %v133, 127
    %v135 = vld [vmem:[#allocation5] sm:$0xff]
    %vm136 = vcmp.eq.s32.totalorder %v120, 0
    %vm137 = vcmp.eq.s32.totalorder %v134, 0
    %vm138 = vmand %vm136, %vm137
    %140 = vset.pattern.permute.xlu0 0
    %141 = vperm.xlu0 %140, %v132
    %v142 = vpop.permute.xlu0 %141
    %v144 = vsel %vm138, %v142, 0.0
    %v145 = vadd.f32 %v135, %v144
    %146 = vst [vmem:[#allocation5] sm:$0xff] %v145
    // Predicated region
    $region22: #{tpu_custom_call.1} parent=1 // pred_check
      _
    $region23: #{tpu_custom_call.1} parent=1 // pred_check_branch
      %148 = sbr.rel (0) target = $region25
    $region24: #{tpu_custom_call.1} parent=1 // pred_region
      %s150 = ssub.s32 128, 128
      %151 = vsyncadd [#allocation4], %s150
      %s153 = sshll.u32 [#allocation5], 4
      %s154 = int_to_ptr.vmem [resolvable:$true] %s153
      %156 = dma.vmem_to_hbm [thread:$0]  %s154, 128, %s3, [#allocation4]
    $region25: #{tpu_custom_call.1} parent=1 // pred_fallthru
      _
    // Predicated region
    $region26: #{tpu_custom_call.1} parent=1 // pred_check
      _
    $region27: #{tpu_custom_call.1} parent=1 // pred_check_branch
      %158 = sbr.rel (0) target = $region29
    $region28: #{tpu_custom_call.1} parent=1 // pred_region
      %159 = dma.done [#allocation4], 128
    $region29: #{tpu_custom_call.1} parent=1 // pred_fallthru
      _
    %160 = vsyncpa [#allocation3], 1
    %161 = vsyncpa [#allocation4], 1

</llo_original>
